<compile_context>
chip_gen: v7x
topology: tpu7x:2x2x1
jax: 0.10.0
libtpu: 0.0.40
codegen_flags: <defaults>
</compile_context>

<pallas_src>
import jax
import jax.numpy as jnp
from jax.experimental import pallas as pl
from jax.experimental.pallas import tpu as pltpu

NUM_STATES = 8    # s.NUM_STATES
NUM_ACTIONS = 4   # s.NUM_ACTIONS
HIDDEN = 16


def _round_up(x, m):
    return ((x + m - 1) // m) * m


def _net_kernel(x_ref, w1t_ref, b1_ref, w2t_ref, b2_ref, out_ref):
    # x_ref:   (block_b, NUM_STATES)   -- native row-major batch tile
    # w1t_ref: (NUM_STATES, HIDDEN)    b1_ref: (1, HIDDEN)
    # w2t_ref: (HIDDEN, NUM_ACTIONS)   b2_ref: (1, NUM_ACTIONS)
    # out_ref: (block_b, NUM_ACTIONS)
    h = jnp.dot(x_ref[...], w1t_ref[...], preferred_element_type=jnp.float32)
    h = jnp.maximum(h + b1_ref[...], 0.0)                       # bias + ReLU, f32
    y = jnp.dot(h, w2t_ref[...], preferred_element_type=jnp.float32)
    out_ref[...] = (y + b2_ref[...]).astype(out_ref.dtype)


def net_forward_ref(x, w1, b1, w2, b2):
    """Plain-XLA reference (and the dispatch target for small batches)."""
    h = jnp.maximum(x @ w1.T + b1, 0.0)
    return h @ w2.T + b2


def net_forward(x, w1, b1, w2, b2, *, min_pallas_batch=4096,
                max_block_b=4096, force_pallas=False):
    """Fused forward pass.

    x:  (B, NUM_STATES) f32
    w1: (HIDDEN, NUM_STATES) f32, b1: (HIDDEN,) f32      (PyTorch layout)
    w2: (NUM_ACTIONS, HIDDEN) f32, b2: (NUM_ACTIONS,) f32
    returns: (B, NUM_ACTIONS) f32
    """
    B = x.shape[0]
    if B < min_pallas_batch and not force_pallas:
        # At small B the pallas_call launch dominates; XLA fusion of two
        # sub-16-wide GEMMs is strictly faster.  Same f32 math as the kernel.
        return net_forward_ref(x, w1, b1, w2, b2)

    # --- Grid sizing -------------------------------------------------------
    # Even number of steps (>= 2) so v7x megacore shards the batch axis; few,
    # large steps so per-step overhead (~0.35us) stays negligible on v5e/v6e;
    # block_b capped so double-buffered lane-padded tiles fit default VMEM.
    b8 = _round_up(B, 8)
    num_steps = max(2, pl.cdiv(b8, max_block_b))
    if num_steps % 2:
        num_steps += 1
    block_b = _round_up(pl.cdiv(b8, num_steps), 8)
    b_padded = num_steps * block_b

    # Pad batch rows only when B doesn't already tile evenly (no-op for the
    # common power-of-two batch sizes -> no extra HBM pass over x).
    xp = x if b_padded == B else jnp.pad(x, ((0, b_padded - B), (0, 0)))

    # Tiny weight-layout plumbing (a few hundred bytes; negligible).
    w1t = jnp.swapaxes(w1, 0, 1).astype(jnp.float32)            # (NUM_STATES, HIDDEN)
    w2t = jnp.swapaxes(w2, 0, 1).astype(jnp.float32)            # (HIDDEN, NUM_ACTIONS)
    b1r = b1.reshape(1, HIDDEN).astype(jnp.float32)
    b2r = b2.reshape(1, NUM_ACTIONS).astype(jnp.float32)

    cost = pl.CostEstimate(
        flops=2 * b_padded * (NUM_STATES * HIDDEN + HIDDEN * NUM_ACTIONS),
        transcendentals=0,
        bytes_accessed=4 * (b_padded * (NUM_STATES + NUM_ACTIONS)
                            + NUM_STATES * HIDDEN + HIDDEN
                            + HIDDEN * NUM_ACTIONS + NUM_ACTIONS),
    )

    y = pl.pallas_call(
        _net_kernel,
        out_shape=jax.ShapeDtypeStruct((b_padded, NUM_ACTIONS), jnp.float32),
        grid_spec=pltpu.PrefetchScalarGridSpec(
            num_scalar_prefetch=0,
            grid=(num_steps,),
            in_specs=[
                # Batch-tiled activations, native layout, double-buffered.
                pl.BlockSpec((block_b, NUM_STATES), lambda i: (i, 0)),
                # Weights / biases: same block every step -> VMEM-resident.
                pl.BlockSpec((NUM_STATES, HIDDEN), lambda i: (0, 0)),
                pl.BlockSpec((1, HIDDEN), lambda i: (0, 0)),
                pl.BlockSpec((HIDDEN, NUM_ACTIONS), lambda i: (0, 0)),
                pl.BlockSpec((1, NUM_ACTIONS), lambda i: (0, 0)),
            ],
            out_specs=pl.BlockSpec((block_b, NUM_ACTIONS), lambda i: (i, 0)),
        ),
        compiler_params=pltpu.CompilerParams(
            dimension_semantics=("parallel",)),      # megacore-shardable on v7x
        cost_estimate=cost,
    )(xp, w1t, b1r, w2t, b2r)

    return y if b_padded == B else y[:B]


def init_params(key):
    """Matches the PyTorch module: weights ~ N(0, 0.1); biases keep the default
    nn.Linear init U(-1/sqrt(fan_in), 1/sqrt(fan_in)). PyTorch (out, in) layout."""
    k1, k2, k3, k4 = jax.random.split(key, 4)
    w1 = 0.1 * jax.random.normal(k1, (HIDDEN, NUM_STATES), jnp.float32)
    w2 = 0.1 * jax.random.normal(k2, (NUM_ACTIONS, HIDDEN), jnp.float32)
    bound1 = 1.0 / jnp.sqrt(float(NUM_STATES))
    bound2 = 1.0 / jnp.sqrt(float(HIDDEN))
    b1 = jax.random.uniform(k3, (HIDDEN,), jnp.float32, -bound1, bound1)
    b2 = jax.random.uniform(k4, (NUM_ACTIONS,), jnp.float32, -bound2, bound2)
    return w1, b1, w2, b2


if __name__ == "__main__":
    key = jax.random.PRNGKey(0)
    kx, kp = jax.random.split(key)
    w1, b1, w2, b2 = init_params(kp)

    # --- Kernel path: 2 parallel grid steps of 256 rows, no padding. --------
    B = 512
    x = jax.random.normal(kx, (B, NUM_STATES), jnp.float32)
    ref = net_forward_ref(x, w1, b1, w2, b2)
    out = jax.block_until_ready(
        net_forward(x, w1, b1, w2, b2, force_pallas=True))
    assert out.shape == (B, NUM_ACTIONS)
    assert jnp.allclose(out, ref, atol=1e-3, rtol=1e-3)

    # Ragged batch -> wrapper pads to the next 8*num_steps rows, still correct.
    B2 = 200
    x2 = jax.random.normal(kx, (B2, NUM_STATES), jnp.float32)
    out2 = jax.block_until_ready(
        net_forward(x2, w1, b1, w2, b2, force_pallas=True))
    assert out2.shape == (B2, NUM_ACTIONS)
    assert jnp.allclose(out2, net_forward_ref(x2, w1, b1, w2, b2),
                        atol=1e-3, rtol=1e-3)

    # Tiny batch (B=2, the DQN action-selection case) dispatches to plain XLA;
    # same f32 math, so results are consistent across the dispatch boundary.
    x3 = jax.random.normal(kx, (2, NUM_STATES), jnp.float32)
    out3 = jax.block_until_ready(net_forward(x3, w1, b1, w2, b2))
    assert out3.shape == (2, NUM_ACTIONS)
    assert jnp.allclose(out3, net_forward_ref(x3, w1, b1, w2, b2),
                        atol=1e-5, rtol=1e-5)

    print("KERNEL_OK")
</pallas_src>

<mosaic_0001>
module attributes {stable_mosaic.version = 11 : i64} {
  func.func @_net_kernel(%arg0: i32, %arg1: memref<256x8xf32, #tpu.memory_space<vmem>>, %arg2: memref<8x16xf32, #tpu.memory_space<vmem>>, %arg3: memref<1x16xf32, #tpu.memory_space<vmem>>, %arg4: memref<16x4xf32, #tpu.memory_space<vmem>>, %arg5: memref<1x4xf32, #tpu.memory_space<vmem>>, %arg6: memref<256x4xf32, #tpu.memory_space<vmem>>) attributes {dimension_semantics = [#tpu.dimension_semantics<parallel>], iteration_bounds = array<i64: 2>, scalar_prefetch = 0 : i64, scratch_operands = 0 : i64, tpu.core_type = #tpu.core_type<tc>, window_params = [{transform_indices = @transform_0, window_bounds = array<i64: 256, 8>}, {pipeline_mode = #tpu.pipeline_mode<synchronous>, transform_indices = @transform_1, window_bounds = array<i64: 8, 16>}, {pipeline_mode = #tpu.pipeline_mode<synchronous>, transform_indices = @transform_2, window_bounds = array<i64: 1, 16>}, {pipeline_mode = #tpu.pipeline_mode<synchronous>, transform_indices = @transform_3, window_bounds = array<i64: 16, 4>}, {pipeline_mode = #tpu.pipeline_mode<synchronous>, transform_indices = @transform_4, window_bounds = array<i64: 1, 4>}, {transform_indices = @transform_5, window_bounds = array<i64: 256, 4>}]} {
    %c0 = arith.constant 0 : index
    %c0_0 = arith.constant 0 : index
    %0 = vector.load %arg1[%c0, %c0_0] : memref<256x8xf32, #tpu.memory_space<vmem>>, vector<256x8xf32>
    %c0_1 = arith.constant 0 : index
    %c0_2 = arith.constant 0 : index
    %1 = vector.load %arg2[%c0_1, %c0_2] : memref<8x16xf32, #tpu.memory_space<vmem>>, vector<8x16xf32>
    %cst = arith.constant dense<0.000000e+00> : vector<256x16xf32>
    %2 = tpu.matmul %0, %1, %cst {dimension_numbers = #tpu.dot_dimension_numbers<[1], [0], [0], [1], [0, 0, 1, 1], [], []>} : vector<256x8xf32>, vector<8x16xf32>, vector<256x16xf32> -> vector<256x16xf32>
    %c0_3 = arith.constant 0 : index
    %c0_4 = arith.constant 0 : index
    %3 = vector.load %arg3[%c0_3, %c0_4] : memref<1x16xf32, #tpu.memory_space<vmem>>, vector<1x16xf32>
    %4 = vector.broadcast %3 : vector<1x16xf32> to vector<256x16xf32>
    %5 = arith.addf %2, %4 : vector<256x16xf32>
    %cst_5 = arith.constant 0.000000e+00 : f32
    %6 = vector.broadcast %cst_5 : f32 to vector<256x16xf32>
    %7 = arith.maximumf %5, %6 : vector<256x16xf32>
    %c0_6 = arith.constant 0 : index
    %c0_7 = arith.constant 0 : index
    %8 = vector.load %arg4[%c0_6, %c0_7] : memref<16x4xf32, #tpu.memory_space<vmem>>, vector<16x4xf32>
    %cst_8 = arith.constant dense<0.000000e+00> : vector<256x4xf32>
    %9 = tpu.matmul %7, %8, %cst_8 {dimension_numbers = #tpu.dot_dimension_numbers<[1], [0], [0], [1], [0, 0, 1, 1], [], []>} : vector<256x16xf32>, vector<16x4xf32>, vector<256x4xf32> -> vector<256x4xf32>
    %c0_9 = arith.constant 0 : index
    %c0_10 = arith.constant 0 : index
    %10 = vector.load %arg5[%c0_9, %c0_10] : memref<1x4xf32, #tpu.memory_space<vmem>>, vector<1x4xf32>
    %11 = vector.broadcast %10 : vector<1x4xf32> to vector<256x4xf32>
    %12 = arith.addf %9, %11 : vector<256x4xf32>
    %c0_11 = arith.constant 0 : index
    %c0_12 = arith.constant 0 : index
    %13 = vector.load %arg6[%c0_11, %c0_12] : memref<256x4xf32, #tpu.memory_space<vmem>>, vector<256x4xf32>
    tpu.vector_store %arg6[%c0_11, %c0_12], %12 {strides = array<i32>} : memref<256x4xf32, #tpu.memory_space<vmem>>, vector<256x4xf32>,
    return
  }
  func.func @transform_0(%arg0: i32) -> (i32, i32) {
    %c0_i32 = arith.constant 0 : i32
    %c0_i32_0 = arith.constant 0 : i32
    return %arg0, %c0_i32 : i32, i32
  }
  func.func @transform_1(%arg0: i32) -> (i32, i32) {
    %c0_i32 = arith.constant 0 : i32
    %c0_i32_0 = arith.constant 0 : i32
    %c0_i32_1 = arith.constant 0 : i32
    return %c0_i32, %c0_i32_0 : i32, i32
  }
  func.func @transform_2(%arg0: i32) -> (i32, i32) {
    %c0_i32 = arith.constant 0 : i32
    %c0_i32_0 = arith.constant 0 : i32
    %c0_i32_1 = arith.constant 0 : i32
    return %c0_i32, %c0_i32_0 : i32, i32
  }
  func.func @transform_3(%arg0: i32) -> (i32, i32) {
    %c0_i32 = arith.constant 0 : i32
    %c0_i32_0 = arith.constant 0 : i32
    %c0_i32_1 = arith.constant 0 : i32
    return %c0_i32, %c0_i32_0 : i32, i32
  }
  func.func @transform_4(%arg0: i32) -> (i32, i32) {
    %c0_i32 = arith.constant 0 : i32
    %c0_i32_0 = arith.constant 0 : i32
    %c0_i32_1 = arith.constant 0 : i32
    return %c0_i32, %c0_i32_0 : i32, i32
  }
  func.func @transform_5(%arg0: i32) -> (i32, i32) {
    %c0_i32 = arith.constant 0 : i32
    %c0_i32_0 = arith.constant 0 : i32
    return %arg0, %c0_i32 : i32, i32
  }
}

</mosaic_0001>

<llo_original>
// kernel: tpu_custom_call.1
$region0: #{tpu_custom_call.1}
  #allocation0 [shape = 'u32[]', space=smem, size = 0x4, offset = 0x4, fixed_abs, tag = 'smem constant byte address 0x4 - core index']
  #allocation1 [shape = 'u32[144,128]{1,0:T(1,128)}', space=vmem, size = 0x12000, scoped, tag = 'internal scratch']
  %s0 = inlined_call_operand.vmem [shape: f32[512,8], index: 0, kind: input, shape index: {}]
  %s1 = inlined_call_operand.vmem [shape: f32[8,16], index: 1, kind: input, shape index: {}]
  %s2 = inlined_call_operand.vmem [shape: f32[1,16], index: 2, kind: input, shape index: {}]
  %s3 = inlined_call_operand.vmem [shape: f32[16,4], index: 3, kind: input, shape index: {}]
  %s4 = inlined_call_operand.vmem [shape: f32[1,4], index: 4, kind: input, shape index: {}]
  %s5 = inlined_call_operand.vmem [shape: f32[512,4], index: 5, kind: output, shape index: {}]
  %s6 = sld [smem:[#allocation0]]
  $region53: #{tpu_custom_call.1} parent=0
    _
  %s8 = ssub.s32 1, %s6
  %s9 = scalar_select 0, %s8, %s6
  loop: start=0, step=1, limit=4
  $region2: #{tpu_custom_call.1} parent=0 // loop_pre_header
    _
  $region3: #{tpu_custom_call.1} parent=0 // loop_header
    %s11 = sphi 0, %s15
    %p12 = scmp.ge.s32.totalorder %s11, 4
    %s21 = sphi 0, %s23
    %s24 = sphi 0, %s21
    %s25 = sphi 0, %s24
    %s41 = sphi 0, %s25
    %s45 = sphi 0, %s45
    %s47 = sphi 0, %s45
    %s48 = sphi 0, %s47
    %s62 = sphi 0, %s48
    %s66 = sphi 0, %s66
    %s68 = sphi 0, %s66
    %s69 = sphi 0, %s68
    %s83 = sphi 0, %s69
    %s87 = sphi 0, %s87
    %s89 = sphi 0, %s87
    %s90 = sphi 0, %s89
    %s104 = sphi 0, %s90
    %s108 = sphi 0, %s108
    %s110 = sphi 0, %s108
    %s111 = sphi 0, %s110
    %s125 = sphi 0, %s111
    %s131 = sphi 0, %s133
    %s134 = sphi 0, %s131
    %s135 = sphi 0, %s134
    %s151 = sphi 0, %s135
  $region4: #{tpu_custom_call.1} parent=0 // loop_header_branch
    %14 = sbr.rel (%p12) target = $region8
  $region5: #{tpu_custom_call.1} parent=0 // loop_body
    %s16 = ssub.s32 %s11, 1
    %s17 = ssub.s32 %s11, 2
    %s18 = sadd.s32 %s11, 1
    %s19 = ssub.s32 %s11, %s18
    %p20 = scmp.eq.s32.totalorder %s19, 0
    %s22 = sadd.s32 %s21, 1
    %s23 = scalar_select %p20, %s21, %s22
    %p26 = pneg %p20
    %p27 = scmp.eq.s32.totalorder %s11, 1
    %p28 = por %p26, %p27
    %p29 = scmp.ne.s32.totalorder %s21, %s24
    %p30 = scmp.eq.s32.totalorder %s11, 0
    %p31 = por %p29, %p30
    %p32 = scmp.ne.s32.totalorder %s21, %s24
    %p33 = scmp.eq.s32.totalorder %s16, 1
    %p34 = por %p32, %p33
    %p35 = scmp.ne.s32.totalorder %s24, %s25
    %p36 = scmp.eq.s32.totalorder %s16, 0
    %p37 = por %p35, %p36
    %p38 = scmp.ne.s32.totalorder %s24, %s25
    %p39 = scmp.eq.s32.totalorder %s17, 1
    %p40 = por %p38, %p39
    %p42 = scmp.ne.s32.totalorder %s25, %s41
    %p43 = scmp.eq.s32.totalorder %s17, 0
    %p44 = por %p42, %p43
    %s46 = sadd.s32 %s45, 1
    %p49 = scmp.eq.s32.totalorder %s11, 1
    %p50 = scmp.ne.s32.totalorder %s45, %s47
    %p51 = scmp.eq.s32.totalorder %s11, 0
    %p52 = por %p50, %p51
    %p53 = scmp.ne.s32.totalorder %s45, %s47
    %p54 = scmp.eq.s32.totalorder %s16, 1
    %p55 = por %p53, %p54
    %p56 = scmp.ne.s32.totalorder %s47, %s48
    %p57 = scmp.eq.s32.totalorder %s16, 0
    %p58 = por %p56, %p57
    %p59 = scmp.ne.s32.totalorder %s47, %s48
    %p60 = scmp.eq.s32.totalorder %s17, 1
    %p61 = por %p59, %p60
    %p63 = scmp.ne.s32.totalorder %s48, %s62
    %p64 = scmp.eq.s32.totalorder %s17, 0
    %p65 = por %p63, %p64
    %s67 = sadd.s32 %s66, 1
    %p70 = scmp.eq.s32.totalorder %s11, 1
    %p71 = scmp.ne.s32.totalorder %s66, %s68
    %p72 = scmp.eq.s32.totalorder %s11, 0
    %p73 = por %p71, %p72
    %p74 = scmp.ne.s32.totalorder %s66, %s68
    %p75 = scmp.eq.s32.totalorder %s16, 1
    %p76 = por %p74, %p75
    %p77 = scmp.ne.s32.totalorder %s68, %s69
    %p78 = scmp.eq.s32.totalorder %s16, 0
    %p79 = por %p77, %p78
    %p80 = scmp.ne.s32.totalorder %s68, %s69
    %p81 = scmp.eq.s32.totalorder %s17, 1
    %p82 = por %p80, %p81
    %p84 = scmp.ne.s32.totalorder %s69, %s83
    %p85 = scmp.eq.s32.totalorder %s17, 0
    %p86 = por %p84, %p85
    %s88 = sadd.s32 %s87, 1
    %p91 = scmp.eq.s32.totalorder %s11, 1
    %p92 = scmp.ne.s32.totalorder %s87, %s89
    %p93 = scmp.eq.s32.totalorder %s11, 0
    %p94 = por %p92, %p93
    %p95 = scmp.ne.s32.totalorder %s87, %s89
    %p96 = scmp.eq.s32.totalorder %s16, 1
    %p97 = por %p95, %p96
    %p98 = scmp.ne.s32.totalorder %s89, %s90
    %p99 = scmp.eq.s32.totalorder %s16, 0
    %p100 = por %p98, %p99
    %p101 = scmp.ne.s32.totalorder %s89, %s90
    %p102 = scmp.eq.s32.totalorder %s17, 1
    %p103 = por %p101, %p102
    %p105 = scmp.ne.s32.totalorder %s90, %s104
    %p106 = scmp.eq.s32.totalorder %s17, 0
    %p107 = por %p105, %p106
    %s109 = sadd.s32 %s108, 1
    %p112 = scmp.eq.s32.totalorder %s11, 1
    %p113 = scmp.ne.s32.totalorder %s108, %s110
    %p114 = scmp.eq.s32.totalorder %s11, 0
    %p115 = por %p113, %p114
    %p116 = scmp.ne.s32.totalorder %s108, %s110
    %p117 = scmp.eq.s32.totalorder %s16, 1
    %p118 = por %p116, %p117
    %p119 = scmp.ne.s32.totalorder %s110, %s111
    %p120 = scmp.eq.s32.totalorder %s16, 0
    %p121 = por %p119, %p120
    %p122 = scmp.ne.s32.totalorder %s110, %s111
    %p123 = scmp.eq.s32.totalorder %s17, 1
    %p124 = por %p122, %p123
    %p126 = scmp.ne.s32.totalorder %s111, %s125
    %p127 = scmp.eq.s32.totalorder %s17, 0
    %p128 = por %p126, %p127
    %s129 = ssub.s32 %s11, %s18
    %p130 = scmp.eq.s32.totalorder %s129, 0
    %s132 = sadd.s32 %s131, 1
    %s133 = scalar_select %p130, %s131, %s132
    %p136 = pneg %p130
    %p137 = scmp.eq.s32.totalorder %s11, 1
    %p138 = por %p136, %p137
    %p139 = scmp.ne.s32.totalorder %s131, %s134
    %p140 = scmp.eq.s32.totalorder %s11, 0
    %p141 = por %p139, %p140
    %p142 = scmp.ne.s32.totalorder %s131, %s134
    %p143 = scmp.eq.s32.totalorder %s16, 1
    %p144 = por %p142, %p143
    %p145 = scmp.ne.s32.totalorder %s134, %s135
    %p146 = scmp.eq.s32.totalorder %s16, 0
    %p147 = por %p145, %p146
    %p148 = scmp.ne.s32.totalorder %s134, %s135
    %p149 = scmp.eq.s32.totalorder %s17, 1
    %p150 = por %p148, %p149
    %p152 = scmp.ne.s32.totalorder %s135, %s151
    %p153 = scmp.eq.s32.totalorder %s17, 0
    %p154 = por %p152, %p153
    %p155 = scmp.le.s32.totalorder 1, %s11
    %p156 = scmp.lt.s32.totalorder %s11, 3
    %p157 = pnand %p155, %p156
    %p158 = pneg %p157
    // Predicated region
    $region9: #{tpu_custom_call.1} parent=5 // pred_check
      _
    $region10: #{tpu_custom_call.1} parent=5 // pred_check_branch
      %160 = sbr.rel (%p157) target = $region12
    $region11: #{tpu_custom_call.1} parent=5 // pred_region
      %s161 = ssub.s32 %s11, 1
      // Predicated region
      $region13: #{tpu_custom_call.1} parent=11 // pred_check
        %p162 = pneg %p58
      $region14: #{tpu_custom_call.1} parent=11 // pred_check_branch
        %164 = sbr.rel (%p162) target = $region16
      $region15: #{tpu_custom_call.1} parent=11 // pred_region
        _
      $region16: #{tpu_custom_call.1} parent=11 // pred_fallthru
        _
      // Predicated region
      $region17: #{tpu_custom_call.1} parent=11 // pred_check
        %p165 = pneg %p79
      $region18: #{tpu_custom_call.1} parent=11 // pred_check_branch
        %167 = sbr.rel (%p165) target = $region20
      $region19: #{tpu_custom_call.1} parent=11 // pred_region
        _
      $region20: #{tpu_custom_call.1} parent=11 // pred_fallthru
        _
      // Predicated region
      $region21: #{tpu_custom_call.1} parent=11 // pred_check
        %p168 = pneg %p100
      $region22: #{tpu_custom_call.1} parent=11 // pred_check_branch
        %170 = sbr.rel (%p168) target = $region24
      $region23: #{tpu_custom_call.1} parent=11 // pred_region
        _
      $region24: #{tpu_custom_call.1} parent=11 // pred_fallthru
        _
      // Predicated region
      $region25: #{tpu_custom_call.1} parent=11 // pred_check
        %p171 = pneg %p121
      $region26: #{tpu_custom_call.1} parent=11 // pred_check_branch
        %173 = sbr.rel (%p171) target = $region28
      $region27: #{tpu_custom_call.1} parent=11 // pred_region
        _
      $region28: #{tpu_custom_call.1} parent=11 // pred_fallthru
        _
    $region12: #{tpu_custom_call.1} parent=5 // pred_fallthru
      _
    %p174 = scmp.lt.s32.totalorder %s11, 2
    // Predicated region
    $region29: #{tpu_custom_call.1} parent=5 // pred_check
      %p175 = pneg %p174
    $region30: #{tpu_custom_call.1} parent=5 // pred_check_branch
      %177 = sbr.rel (%p175) target = $region32
    $region31: #{tpu_custom_call.1} parent=5 // pred_region
      // Predicated region
      $region33: #{tpu_custom_call.1} parent=31 // pred_check
        %p178 = pneg %p31
      $region34: #{tpu_custom_call.1} parent=31 // pred_check_branch
        %180 = sbr.rel (%p178) target = $region36
      $region35: #{tpu_custom_call.1} parent=31 // pred_region
        %s181 = smul.u32 32, %s11
        %p182 = scmp.lt.s32.totalorder %s181, 63
        %s183 = scalar_select %p182, %s181, 63
        %s184 = smul.addr %s183, 8
        %s185 = scalar_lea.vmem %s0, %s184
        %s186 = smul.u32 32, %s11
      $region36: #{tpu_custom_call.1} parent=31 // pred_fallthru
        _
    $region32: #{tpu_custom_call.1} parent=5 // pred_fallthru
      _
    %p187 = scmp.le.s32.totalorder 1, %s11
    %p188 = scmp.lt.s32.totalorder %s11, 3
    %p189 = pnand %p187, %p188
    %p190 = pneg %p189
    // Predicated region
    $region37: #{tpu_custom_call.1} parent=5 // pred_check
      _
    $region38: #{tpu_custom_call.1} parent=5 // pred_check_branch
      %192 = sbr.rel (%p189) target = $region40
    $region39: #{tpu_custom_call.1} parent=5 // pred_region
      %s193 = ssub.s32 %s11, 1
      %s194 = smul.u32 32, %s16
      %p195 = scmp.lt.s32.totalorder %s194, 63
      %s196 = scalar_select %p195, %s194, 63
      %s197 = smul.addr %s196, 8
      %s198 = scalar_lea.vmem %s0, %s197
      %p199 = pneg %p37
      %p200 = pneg %p34
      %p201 = pneg %p58
      %p202 = pneg %p55
      %p203 = pneg %p79
      %p204 = pneg %p76
      %p205 = pneg %p100
      %p206 = pneg %p97
      %p207 = pneg %p121
      %p208 = pneg %p118
      %p209 = pneg %p147
      %p210 = pneg %p144
      %s211 = smul.u32 32, %s16
      %p212 = scmp.lt.s32.totalorder %s211, 63
      %s213 = scalar_select %p212, %s211, 63
      %s214 = smul.addr %s213, 8
      %s215 = scalar_lea.vmem %s5, %s214
      %s216 = smul.u32 32, %s16
      %p217 = scmp.lt.s32.totalorder %s216, 63
      %s218 = scalar_select %p217, %s216, 63
      %s219 = smul.addr %s218, 8
      %s220 = scalar_lea.vmem %s0, %s219
      %s221 = smul.u32 32, %s16
      %s222 = smul.u32 32, %s16
      %p223 = scmp.lt.s32.totalorder %s222, 63
      %s224 = scalar_select %p223, %s222, 63
      %s225 = smul.addr %s224, 8
      %s226 = scalar_lea.vmem %s5, %s225
      %s227 = smul.u32 32, %s16
      %v228 = vld [vmem:[%s220] sm:$0xff]
      %v229 = vld [vmem:[%s220 + $0x8] sm:$0xff]
      %v230 = vld [vmem:[%s220 + $0x10] sm:$0xff]
      %v231 = vld [vmem:[%s220 + $0x18] sm:$0xff]
      %v232 = vld [vmem:[%s220 + $0x20] sm:$0xff]
      %v233 = vld [vmem:[%s220 + $0x28] sm:$0xff]
      %v234 = vld [vmem:[%s220 + $0x30] sm:$0xff]
      %v235 = vld [vmem:[%s220 + $0x38] sm:$0xff]
      %v236 = vld [vmem:[%s220 + $0x40] sm:$0xff]
      %v237 = vld [vmem:[%s220 + $0x48] sm:$0xff]
      %v238 = vld [vmem:[%s220 + $0x50] sm:$0xff]
      %v239 = vld [vmem:[%s220 + $0x58] sm:$0xff]
      %v240 = vld [vmem:[%s220 + $0x60] sm:$0xff]
      %v241 = vld [vmem:[%s220 + $0x68] sm:$0xff]
      %v242 = vld [vmem:[%s220 + $0x70] sm:$0xff]
      %v243 = vld [vmem:[%s220 + $0x78] sm:$0xff]
      %v244 = vld [vmem:[%s220 + $0x80] sm:$0xff]
      %v245 = vld [vmem:[%s220 + $0x88] sm:$0xff]
      %v246 = vld [vmem:[%s220 + $0x90] sm:$0xff]
      %v247 = vld [vmem:[%s220 + $0x98] sm:$0xff]
      %v248 = vld [vmem:[%s220 + $0xa0] sm:$0xff]
      %v249 = vld [vmem:[%s220 + $0xa8] sm:$0xff]
      %v250 = vld [vmem:[%s220 + $0xb0] sm:$0xff]
      %v251 = vld [vmem:[%s220 + $0xb8] sm:$0xff]
      %v252 = vld [vmem:[%s220 + $0xc0] sm:$0xff]
      %v253 = vld [vmem:[%s220 + $0xc8] sm:$0xff]
      %v254 = vld [vmem:[%s220 + $0xd0] sm:$0xff]
      %v255 = vld [vmem:[%s220 + $0xd8] sm:$0xff]
      %v256 = vld [vmem:[%s220 + $0xe0] sm:$0xff]
      %v257 = vld [vmem:[%s220 + $0xe8] sm:$0xff]
      %v258 = vld [vmem:[%s220 + $0xf0] sm:$0xff]
      %v259 = vld [vmem:[%s220 + $0xf8] sm:$0xff]
      %v260 = vld [vmem:[%s1] sm:$0xff]
      %v261 = vld [vmem:[%s2] sm:$0x1]
      %v263 = vlaneseq
      %v264 = vshrl.u32 %v263, 7
      %v265 = vsub.s32 0, %v264
      %v266 = vrot.slane %v261, %v265
      %vm268 = vcmask 64512
      %v270 = vsel %vm268, %v228, 0
      %v273 = vsel %vm268, %v229, 0
      %v276 = vsel %vm268, %v230, 0
      %v279 = vsel %vm268, %v231, 0
      %v282 = vsel %vm268, %v232, 0
      %v285 = vsel %vm268, %v233, 0
      %v288 = vsel %vm268, %v234, 0
      %v291 = vsel %vm268, %v235, 0
      %v294 = vsel %vm268, %v236, 0
      %v297 = vsel %vm268, %v237, 0
      %v300 = vsel %vm268, %v238, 0
      %v303 = vsel %vm268, %v239, 0
      %v306 = vsel %vm268, %v240, 0
      %v309 = vsel %vm268, %v241, 0
      %v312 = vsel %vm268, %v242, 0
      %v315 = vsel %vm268, %v243, 0
      %v318 = vsel %vm268, %v244, 0
      %v321 = vsel %vm268, %v245, 0
      %v324 = vsel %vm268, %v246, 0
      %v327 = vsel %vm268, %v247, 0
      %v330 = vsel %vm268, %v248, 0
      %v333 = vsel %vm268, %v249, 0
      %v336 = vsel %vm268, %v250, 0
      %v339 = vsel %vm268, %v251, 0
      %v342 = vsel %vm268, %v252, 0
      %v345 = vsel %vm268, %v253, 0
      %v348 = vsel %vm268, %v254, 0
      %v351 = vsel %vm268, %v255, 0
      %v354 = vsel %vm268, %v256, 0
      %v357 = vsel %vm268, %v257, 0
      %v360 = vsel %vm268, %v258, 0
      %v363 = vsel %vm268, %v259, 0
      %365 = vmatprep.subr.mxu0 0.0
      %366 = vmatpush1.msra.mxu0 %v260
      %367 = vmatprep.subr.mxu0 0.0
      %368 = vmatpush1.msra.mxu0 0.0
      %369 = vmatprep.subr.mxu0 0.0
      %370 = vmatpush1.msra.mxu0 0.0
      %371 = vmatprep.subr.mxu0 0.0
      %372 = vmatpush1.msra.mxu0 0.0
      %373 = vmatprep.subr.mxu0 0.0
      %374 = vmatpush1.msra.mxu0 0.0
      %375 = vmatprep.subr.mxu0 0.0
      %376 = vmatpush1.msra.mxu0 0.0
      %377 = vmatprep.subr.mxu0 0.0
      %378 = vmatpush1.msra.mxu0 0.0
      %379 = vmatprep.subr.mxu0 0.0
      %380 = vmatpush1.msra.mxu0 0.0
      %381 = vmatprep.subr.mxu0 0.0
      %382 = vmatpush1.msra.mxu0 0.0
      %383 = vmatprep.subr.mxu0 0.0
      %384 = vmatpush1.msra.mxu0 0.0
      %385 = vmatprep.subr.mxu0 0.0
      %386 = vmatpush1.msra.mxu0 0.0
      %387 = vmatprep.subr.mxu0 0.0
      %388 = vmatpush1.msra.mxu0 0.0
      %389 = vmatprep.subr.mxu0 0.0
      %390 = vmatpush1.msra.mxu0 0.0
      %391 = vmatprep.subr.mxu0 0.0
      %392 = vmatpush1.msra.mxu0 0.0
      %393 = vmatprep.subr.mxu0 0.0
      %394 = vmatpush1.msra.mxu0 0.0
      %395 = vmatprep.subr.mxu0 0.0
      %396 = vmatpush1.msra.mxu0 0.0
      %397 = vmatprep.subr.mxu0 0.0
      %398 = vmatpush1.msra.mxu0 0.0
      %399 = vmatprep.subr.mxu0 0.0
      %400 = vmatpush1.msra.mxu0 0.0
      %401 = vmatprep.subr.mxu0 0.0
      %402 = vmatpush1.msra.mxu0 0.0
      %403 = vmatprep.subr.mxu0 0.0
      %404 = vmatpush1.msra.mxu0 0.0
      %405 = vmatprep.subr.mxu0 0.0
      %406 = vmatpush1.msra.mxu0 0.0
      %407 = vmatprep.subr.mxu0 0.0
      %408 = vmatpush1.msra.mxu0 0.0
      %409 = vmatprep.subr.mxu0 0.0
      %410 = vmatpush1.msra.mxu0 0.0
      %411 = vmatprep.subr.mxu0 0.0
      %412 = vmatpush1.msra.mxu0 0.0
      %413 = vmatprep.subr.mxu0 0.0
      %414 = vmatpush1.msra.mxu0 0.0
      %415 = vmatprep.subr.mxu0 0.0
      %416 = vmatpush1.msra.mxu0 0.0
      %417 = vmatprep.subr.mxu0 0.0
      %418 = vmatpush1.msra.mxu0 0.0
      %419 = vmatprep.subr.mxu0 0.0
      %420 = vmatpush1.msra.mxu0 0.0
      %421 = vmatprep.subr.mxu0 0.0
      %422 = vmatpush1.msra.mxu0 0.0
      %423 = vmatprep.subr.mxu0 0.0
      %424 = vmatpush1.msra.mxu0 0.0
      %425 = vmatprep.subr.mxu0 0.0
      %426 = vmatpush1.msra.mxu0 0.0
      %427 = vmatprep.subr.mxu0 0.0
      %428 = vmatpush1.msra.mxu0 0.0
      %429 = vmatprep.mubr.f32.mxu0 0.0
      %430 = vmatmul.mubr.f32.gmra.mrb[0].mxu0 %v270
      %v431 = vpop.f32.mrb[0].mxu0
      %v432 = vadd.f32 %v266, %v431
      %v433 = vpop.f32.mrb[0].mxu0
      %434 = vmatprep.mubr.f32.mxu0 0.0
      %435 = vmatmul.mubr.f32.gmra.mrb[0].mxu0 %v273
      %v436 = vpop.f32.mrb[0].mxu0
      %v437 = vadd.f32 %v266, %v436
      %v438 = vpop.f32.mrb[0].mxu0
      %439 = vmatprep.mubr.f32.mxu0 0.0
      %440 = vmatmul.mubr.f32.gmra.mrb[0].mxu0 %v276
      %v441 = vpop.f32.mrb[0].mxu0
      %v442 = vadd.f32 %v266, %v441
      %v443 = vpop.f32.mrb[0].mxu0
      %444 = vmatprep.mubr.f32.mxu0 0.0
      %445 = vmatmul.mubr.f32.gmra.mrb[0].mxu0 %v279
      %v446 = vpop.f32.mrb[0].mxu0
      %v447 = vadd.f32 %v266, %v446
      %v448 = vpop.f32.mrb[0].mxu0
      %449 = vmatprep.mubr.f32.mxu0 0.0
      %450 = vmatmul.mubr.f32.gmra.mrb[0].mxu0 %v282
      %v451 = vpop.f32.mrb[0].mxu0
      %v452 = vadd.f32 %v266, %v451
      %v453 = vpop.f32.mrb[0].mxu0
      %454 = vmatprep.mubr.f32.mxu0 0.0
      %455 = vmatmul.mubr.f32.gmra.mrb[0].mxu0 %v285
      %v456 = vpop.f32.mrb[0].mxu0
      %v457 = vadd.f32 %v266, %v456
      %v458 = vpop.f32.mrb[0].mxu0
      %459 = vmatprep.mubr.f32.mxu0 0.0
      %460 = vmatmul.mubr.f32.gmra.mrb[0].mxu0 %v288
      %v461 = vpop.f32.mrb[0].mxu0
      %v462 = vadd.f32 %v266, %v461
      %v463 = vpop.f32.mrb[0].mxu0
      %464 = vmatprep.mubr.f32.mxu0 0.0
      %465 = vmatmul.mubr.f32.gmra.mrb[0].mxu0 %v291
      %v466 = vpop.f32.mrb[0].mxu0
      %v467 = vadd.f32 %v266, %v466
      %v468 = vpop.f32.mrb[0].mxu0
      %469 = vmatprep.mubr.f32.mxu0 0.0
      %470 = vmatmul.mubr.f32.gmra.mrb[0].mxu0 %v294
      %v471 = vpop.f32.mrb[0].mxu0
      %v472 = vadd.f32 %v266, %v471
      %v473 = vpop.f32.mrb[0].mxu0
      %474 = vmatprep.mubr.f32.mxu0 0.0
      %475 = vmatmul.mubr.f32.gmra.mrb[0].mxu0 %v297
      %v476 = vpop.f32.mrb[0].mxu0
      %v477 = vadd.f32 %v266, %v476
      %v478 = vpop.f32.mrb[0].mxu0
      %479 = vmatprep.mubr.f32.mxu0 0.0
      %480 = vmatmul.mubr.f32.gmra.mrb[0].mxu0 %v300
      %v481 = vpop.f32.mrb[0].mxu0
      %v482 = vadd.f32 %v266, %v481
      %v483 = vpop.f32.mrb[0].mxu0
      %484 = vmatprep.mubr.f32.mxu0 0.0
      %485 = vmatmul.mubr.f32.gmra.mrb[0].mxu0 %v303
      %v486 = vpop.f32.mrb[0].mxu0
      %v487 = vadd.f32 %v266, %v486
      %v488 = vpop.f32.mrb[0].mxu0
      %489 = vmatprep.mubr.f32.mxu0 0.0
      %490 = vmatmul.mubr.f32.gmra.mrb[0].mxu0 %v306
      %v491 = vpop.f32.mrb[0].mxu0
      %v492 = vadd.f32 %v266, %v491
      %v493 = vpop.f32.mrb[0].mxu0
      %494 = vmatprep.mubr.f32.mxu0 0.0
      %495 = vmatmul.mubr.f32.gmra.mrb[0].mxu0 %v309
      %v496 = vpop.f32.mrb[0].mxu0
      %v497 = vadd.f32 %v266, %v496
      %v498 = vpop.f32.mrb[0].mxu0
      %499 = vmatprep.mubr.f32.mxu0 0.0
      %500 = vmatmul.mubr.f32.gmra.mrb[0].mxu0 %v312
      %v501 = vpop.f32.mrb[0].mxu0
      %v502 = vadd.f32 %v266, %v501
      %v503 = vpop.f32.mrb[0].mxu0
      %504 = vmatprep.mubr.f32.mxu0 0.0
      %505 = vmatmul.mubr.f32.gmra.mrb[0].mxu0 %v315
      %v506 = vpop.f32.mrb[0].mxu0
      %v507 = vadd.f32 %v266, %v506
      %v508 = vpop.f32.mrb[0].mxu0
      %509 = vmatprep.mubr.f32.mxu0 0.0
      %510 = vmatmul.mubr.f32.gmra.mrb[0].mxu0 %v318
      %v511 = vpop.f32.mrb[0].mxu0
      %v512 = vadd.f32 %v266, %v511
      %v513 = vpop.f32.mrb[0].mxu0
      %514 = vmatprep.mubr.f32.mxu0 0.0
      %515 = vmatmul.mubr.f32.gmra.mrb[0].mxu0 %v321
      %v516 = vpop.f32.mrb[0].mxu0
      %v517 = vadd.f32 %v266, %v516
      %v518 = vpop.f32.mrb[0].mxu0
      %519 = vmatprep.mubr.f32.mxu0 0.0
      %520 = vmatmul.mubr.f32.gmra.mrb[0].mxu0 %v324
      %v521 = vpop.f32.mrb[0].mxu0
      %v522 = vadd.f32 %v266, %v521
      %v523 = vpop.f32.mrb[0].mxu0
      %524 = vmatprep.mubr.f32.mxu0 0.0
      %525 = vmatmul.mubr.f32.gmra.mrb[0].mxu0 %v327
      %v526 = vpop.f32.mrb[0].mxu0
      %v527 = vadd.f32 %v266, %v526
      %v528 = vpop.f32.mrb[0].mxu0
      %529 = vmatprep.mubr.f32.mxu0 0.0
      %530 = vmatmul.mubr.f32.gmra.mrb[0].mxu0 %v330
      %v531 = vpop.f32.mrb[0].mxu0
      %v532 = vadd.f32 %v266, %v531
      %v533 = vpop.f32.mrb[0].mxu0
      %534 = vmatprep.mubr.f32.mxu0 0.0
      %535 = vmatmul.mubr.f32.gmra.mrb[0].mxu0 %v333
      %v536 = vpop.f32.mrb[0].mxu0
      %v537 = vadd.f32 %v266, %v536
      %v538 = vpop.f32.mrb[0].mxu0
      %539 = vmatprep.mubr.f32.mxu0 0.0
      %540 = vmatmul.mubr.f32.gmra.mrb[0].mxu0 %v336
      %v541 = vpop.f32.mrb[0].mxu0
      %v542 = vadd.f32 %v266, %v541
      %v543 = vpop.f32.mrb[0].mxu0
      %544 = vmatprep.mubr.f32.mxu0 0.0
      %545 = vmatmul.mubr.f32.gmra.mrb[0].mxu0 %v339
      %v546 = vpop.f32.mrb[0].mxu0
      %v547 = vadd.f32 %v266, %v546
      %v548 = vpop.f32.mrb[0].mxu0
      %549 = vmatprep.mubr.f32.mxu0 0.0
      %550 = vmatmul.mubr.f32.gmra.mrb[0].mxu0 %v342
      %v551 = vpop.f32.mrb[0].mxu0
      %v552 = vadd.f32 %v266, %v551
      %v553 = vpop.f32.mrb[0].mxu0
      %554 = vmatprep.mubr.f32.mxu0 0.0
      %555 = vmatmul.mubr.f32.gmra.mrb[0].mxu0 %v345
      %v556 = vpop.f32.mrb[0].mxu0
      %v557 = vadd.f32 %v266, %v556
      %v558 = vpop.f32.mrb[0].mxu0
      %559 = vmatprep.mubr.f32.mxu0 0.0
      %560 = vmatmul.mubr.f32.gmra.mrb[0].mxu0 %v348
      %v561 = vpop.f32.mrb[0].mxu0
      %v562 = vadd.f32 %v266, %v561
      %v563 = vpop.f32.mrb[0].mxu0
      %564 = vmatprep.mubr.f32.mxu0 0.0
      %565 = vmatmul.mubr.f32.gmra.mrb[0].mxu0 %v351
      %v566 = vpop.f32.mrb[0].mxu0
      %v567 = vadd.f32 %v266, %v566
      %v568 = vpop.f32.mrb[0].mxu0
      %569 = vmatprep.mubr.f32.mxu0 0.0
      %570 = vmatmul.mubr.f32.gmra.mrb[0].mxu0 %v354
      %v571 = vpop.f32.mrb[0].mxu0
      %v572 = vadd.f32 %v266, %v571
      %v573 = vpop.f32.mrb[0].mxu0
      %574 = vmatprep.mubr.f32.mxu0 0.0
      %575 = vmatmul.mubr.f32.gmra.mrb[0].mxu0 %v357
      %v576 = vpop.f32.mrb[0].mxu0
      %v577 = vadd.f32 %v266, %v576
      %v578 = vpop.f32.mrb[0].mxu0
      %579 = vmatprep.mubr.f32.mxu0 0.0
      %580 = vmatmul.mubr.f32.gmra.mrb[0].mxu0 %v360
      %v581 = vpop.f32.mrb[0].mxu0
      %v582 = vadd.f32 %v266, %v581
      %v583 = vpop.f32.mrb[0].mxu0
      %584 = vmatprep.mubr.f32.mxu0 0.0
      %585 = vmatmul.mubr.f32.gmra.mrb[0].mxu0 %v363
      %v586 = vpop.f32.mrb[0].mxu0
      %v587 = vadd.f32 %v266, %v586
      %v588 = vpop.f32.mrb[0].mxu0
      %589 = vdwg.mxu0
      %v590 = vmax.f32 %v432, 0.0
      %v591 = vmax.f32 %v437, 0.0
      %v592 = vmax.f32 %v442, 0.0
      %v593 = vmax.f32 %v447, 0.0
      %v594 = vmax.f32 %v452, 0.0
      %v595 = vmax.f32 %v457, 0.0
      %v596 = vmax.f32 %v462, 0.0
      %v597 = vmax.f32 %v467, 0.0
      %v598 = vmax.f32 %v472, 0.0
      %v599 = vmax.f32 %v477, 0.0
      %v600 = vmax.f32 %v482, 0.0
      %v601 = vmax.f32 %v487, 0.0
      %v602 = vmax.f32 %v492, 0.0
      %v603 = vmax.f32 %v497, 0.0
      %v604 = vmax.f32 %v502, 0.0
      %v605 = vmax.f32 %v507, 0.0
      %v606 = vmax.f32 %v512, 0.0
      %v607 = vmax.f32 %v517, 0.0
      %v608 = vmax.f32 %v522, 0.0
      %v609 = vmax.f32 %v527, 0.0
      %v610 = vmax.f32 %v532, 0.0
      %v611 = vmax.f32 %v537, 0.0
      %v612 = vmax.f32 %v542, 0.0
      %v613 = vmax.f32 %v547, 0.0
      %v614 = vmax.f32 %v552, 0.0
      %v615 = vmax.f32 %v557, 0.0
      %v616 = vmax.f32 %v562, 0.0
      %v617 = vmax.f32 %v567, 0.0
      %v618 = vmax.f32 %v572, 0.0
      %v619 = vmax.f32 %v577, 0.0
      %v620 = vmax.f32 %v582, 0.0
      %v621 = vmax.f32 %v587, 0.0
      %v622 = vld [vmem:[%s3] sm:$0xff]
      %v623 = vld [vmem:[%s3 + $0x8] sm:$0xff]
      %v624 = vld [vmem:[%s4] sm:$0x1]
      %v626 = vlaneseq
      %v627 = vshrl.u32 %v626, 7
      %v628 = vsub.s32 0, %v627
      %v629 = vrot.slane %v624, %v628
      %vm631 = vcmask 130048
      %v633 = vsel %vm631, %v590, 0
      %v636 = vsel %vm631, %v591, 0
      %v639 = vsel %vm631, %v592, 0
      %v642 = vsel %vm631, %v593, 0
      %v645 = vsel %vm631, %v594, 0
      %v648 = vsel %vm631, %v595, 0
      %v651 = vsel %vm631, %v596, 0
      %v654 = vsel %vm631, %v597, 0
      %v657 = vsel %vm631, %v598, 0
      %v660 = vsel %vm631, %v599, 0
      %v663 = vsel %vm631, %v600, 0
      %v666 = vsel %vm631, %v601, 0
      %v669 = vsel %vm631, %v602, 0
      %v672 = vsel %vm631, %v603, 0
      %v675 = vsel %vm631, %v604, 0
      %v678 = vsel %vm631, %v605, 0
      %v681 = vsel %vm631, %v606, 0
      %v684 = vsel %vm631, %v607, 0
      %v687 = vsel %vm631, %v608, 0
      %v690 = vsel %vm631, %v609, 0
      %v693 = vsel %vm631, %v610, 0
      %v696 = vsel %vm631, %v611, 0
      %v699 = vsel %vm631, %v612, 0
      %v702 = vsel %vm631, %v613, 0
      %v705 = vsel %vm631, %v614, 0
      %v708 = vsel %vm631, %v615, 0
      %v711 = vsel %vm631, %v616, 0
      %v714 = vsel %vm631, %v617, 0
      %v717 = vsel %vm631, %v618, 0
      %v720 = vsel %vm631, %v619, 0
      %v723 = vsel %vm631, %v620, 0
      %v726 = vsel %vm631, %v621, 0
      %728 = vmatprep.subr.mxu0 0.0
      %729 = vmatpush1.msra.mxu0 %v622
      %730 = vmatprep.subr.mxu0 0.0
      %731 = vmatpush1.msra.mxu0 %v623
      %732 = vmatprep.subr.mxu0 0.0
      %733 = vmatpush1.msra.mxu0 0.0
      %734 = vmatprep.subr.mxu0 0.0
      %735 = vmatpush1.msra.mxu0 0.0
      %736 = vmatprep.subr.mxu0 0.0
      %737 = vmatpush1.msra.mxu0 0.0
      %738 = vmatprep.subr.mxu0 0.0
      %739 = vmatpush1.msra.mxu0 0.0
      %740 = vmatprep.subr.mxu0 0.0
      %741 = vmatpush1.msra.mxu0 0.0
      %742 = vmatprep.subr.mxu0 0.0
      %743 = vmatpush1.msra.mxu0 0.0
      %744 = vmatprep.subr.mxu0 0.0
      %745 = vmatpush1.msra.mxu0 0.0
      %746 = vmatprep.subr.mxu0 0.0
      %747 = vmatpush1.msra.mxu0 0.0
      %748 = vmatprep.subr.mxu0 0.0
      %749 = vmatpush1.msra.mxu0 0.0
      %750 = vmatprep.subr.mxu0 0.0
      %751 = vmatpush1.msra.mxu0 0.0
      %752 = vmatprep.subr.mxu0 0.0
      %753 = vmatpush1.msra.mxu0 0.0
      %754 = vmatprep.subr.mxu0 0.0
      %755 = vmatpush1.msra.mxu0 0.0
      %756 = vmatprep.subr.mxu0 0.0
      %757 = vmatpush1.msra.mxu0 0.0
      %758 = vmatprep.subr.mxu0 0.0
      %759 = vmatpush1.msra.mxu0 0.0
      %760 = vmatprep.subr.mxu0 0.0
      %761 = vmatpush1.msra.mxu0 0.0
      %762 = vmatprep.subr.mxu0 0.0
      %763 = vmatpush1.msra.mxu0 0.0
      %764 = vmatprep.subr.mxu0 0.0
      %765 = vmatpush1.msra.mxu0 0.0
      %766 = vmatprep.subr.mxu0 0.0
      %767 = vmatpush1.msra.mxu0 0.0
      %768 = vmatprep.subr.mxu0 0.0
      %769 = vmatpush1.msra.mxu0 0.0
      %770 = vmatprep.subr.mxu0 0.0
      %771 = vmatpush1.msra.mxu0 0.0
      %772 = vmatprep.subr.mxu0 0.0
      %773 = vmatpush1.msra.mxu0 0.0
      %774 = vmatprep.subr.mxu0 0.0
      %775 = vmatpush1.msra.mxu0 0.0
      %776 = vmatprep.subr.mxu0 0.0
      %777 = vmatpush1.msra.mxu0 0.0
      %778 = vmatprep.subr.mxu0 0.0
      %779 = vmatpush1.msra.mxu0 0.0
      %780 = vmatprep.subr.mxu0 0.0
      %781 = vmatpush1.msra.mxu0 0.0
      %782 = vmatprep.subr.mxu0 0.0
      %783 = vmatpush1.msra.mxu0 0.0
      %784 = vmatprep.subr.mxu0 0.0
      %785 = vmatpush1.msra.mxu0 0.0
      %786 = vmatprep.subr.mxu0 0.0
      %787 = vmatpush1.msra.mxu0 0.0
      %788 = vmatprep.subr.mxu0 0.0
      %789 = vmatpush1.msra.mxu0 0.0
      %790 = vmatprep.subr.mxu0 0.0
      %791 = vmatpush1.msra.mxu0 0.0
      %792 = vmatprep.mubr.f32.mxu0 0.0
      %793 = vmatmul.mubr.f32.gmra.mrb[0].mxu0 %v633
      %v794 = vpop.f32.mrb[0].mxu0
      %v795 = vadd.f32 %v629, %v794
      %v796 = vpop.f32.mrb[0].mxu0
      %797 = vmatprep.mubr.f32.mxu0 0.0
      %798 = vmatmul.mubr.f32.gmra.mrb[0].mxu0 %v636
      %v799 = vpop.f32.mrb[0].mxu0
      %v800 = vadd.f32 %v629, %v799
      %v801 = vpop.f32.mrb[0].mxu0
      %802 = vmatprep.mubr.f32.mxu0 0.0
      %803 = vmatmul.mubr.f32.gmra.mrb[0].mxu0 %v639
      %v804 = vpop.f32.mrb[0].mxu0
      %v805 = vadd.f32 %v629, %v804
      %v806 = vpop.f32.mrb[0].mxu0
      %807 = vmatprep.mubr.f32.mxu0 0.0
      %808 = vmatmul.mubr.f32.gmra.mrb[0].mxu0 %v642
      %v809 = vpop.f32.mrb[0].mxu0
      %v810 = vadd.f32 %v629, %v809
      %v811 = vpop.f32.mrb[0].mxu0
      %812 = vmatprep.mubr.f32.mxu0 0.0
      %813 = vmatmul.mubr.f32.gmra.mrb[0].mxu0 %v645
      %v814 = vpop.f32.mrb[0].mxu0
      %v815 = vadd.f32 %v629, %v814
      %v816 = vpop.f32.mrb[0].mxu0
      %817 = vmatprep.mubr.f32.mxu0 0.0
      %818 = vmatmul.mubr.f32.gmra.mrb[0].mxu0 %v648
      %v819 = vpop.f32.mrb[0].mxu0
      %v820 = vadd.f32 %v629, %v819
      %v821 = vpop.f32.mrb[0].mxu0
      %822 = vmatprep.mubr.f32.mxu0 0.0
      %823 = vmatmul.mubr.f32.gmra.mrb[0].mxu0 %v651
      %v824 = vpop.f32.mrb[0].mxu0
      %v825 = vadd.f32 %v629, %v824
      %v826 = vpop.f32.mrb[0].mxu0
      %827 = vmatprep.mubr.f32.mxu0 0.0
      %828 = vmatmul.mubr.f32.gmra.mrb[0].mxu0 %v654
      %v829 = vpop.f32.mrb[0].mxu0
      %v830 = vadd.f32 %v629, %v829
      %v831 = vpop.f32.mrb[0].mxu0
      %832 = vmatprep.mubr.f32.mxu0 0.0
      %833 = vmatmul.mubr.f32.gmra.mrb[0].mxu0 %v657
      %v834 = vpop.f32.mrb[0].mxu0
      %v835 = vadd.f32 %v629, %v834
      %v836 = vpop.f32.mrb[0].mxu0
      %837 = vmatprep.mubr.f32.mxu0 0.0
      %838 = vmatmul.mubr.f32.gmra.mrb[0].mxu0 %v660
      %v839 = vpop.f32.mrb[0].mxu0
      %v840 = vadd.f32 %v629, %v839
      %v841 = vpop.f32.mrb[0].mxu0
      %842 = vmatprep.mubr.f32.mxu0 0.0
      %843 = vmatmul.mubr.f32.gmra.mrb[0].mxu0 %v663
      %v844 = vpop.f32.mrb[0].mxu0
      %v845 = vadd.f32 %v629, %v844
      %v846 = vpop.f32.mrb[0].mxu0
      %847 = vmatprep.mubr.f32.mxu0 0.0
      %848 = vmatmul.mubr.f32.gmra.mrb[0].mxu0 %v666
      %v849 = vpop.f32.mrb[0].mxu0
      %v850 = vadd.f32 %v629, %v849
      %v851 = vpop.f32.mrb[0].mxu0
      %852 = vmatprep.mubr.f32.mxu0 0.0
      %853 = vmatmul.mubr.f32.gmra.mrb[0].mxu0 %v669
      %v854 = vpop.f32.mrb[0].mxu0
      %v855 = vadd.f32 %v629, %v854
      %v856 = vpop.f32.mrb[0].mxu0
      %857 = vmatprep.mubr.f32.mxu0 0.0
      %858 = vmatmul.mubr.f32.gmra.mrb[0].mxu0 %v672
      %v859 = vpop.f32.mrb[0].mxu0
      %v860 = vadd.f32 %v629, %v859
      %v861 = vpop.f32.mrb[0].mxu0
      %862 = vmatprep.mubr.f32.mxu0 0.0
      %863 = vmatmul.mubr.f32.gmra.mrb[0].mxu0 %v675
      %v864 = vpop.f32.mrb[0].mxu0
      %v865 = vadd.f32 %v629, %v864
      %v866 = vpop.f32.mrb[0].mxu0
      %867 = vmatprep.mubr.f32.mxu0 0.0
      %868 = vmatmul.mubr.f32.gmra.mrb[0].mxu0 %v678
      %v869 = vpop.f32.mrb[0].mxu0
      %v870 = vadd.f32 %v629, %v869
      %v871 = vpop.f32.mrb[0].mxu0
      %872 = vmatprep.mubr.f32.mxu0 0.0
      %873 = vmatmul.mubr.f32.gmra.mrb[0].mxu0 %v681
      %v874 = vpop.f32.mrb[0].mxu0
      %v875 = vadd.f32 %v629, %v874
      %v876 = vpop.f32.mrb[0].mxu0
      %877 = vmatprep.mubr.f32.mxu0 0.0
      %878 = vmatmul.mubr.f32.gmra.mrb[0].mxu0 %v684
      %v879 = vpop.f32.mrb[0].mxu0
      %v880 = vadd.f32 %v629, %v879
      %v881 = vpop.f32.mrb[0].mxu0
      %882 = vmatprep.mubr.f32.mxu0 0.0
      %883 = vmatmul.mubr.f32.gmra.mrb[0].mxu0 %v687
      %v884 = vpop.f32.mrb[0].mxu0
      %v885 = vadd.f32 %v629, %v884
      %v886 = vpop.f32.mrb[0].mxu0
      %887 = vmatprep.mubr.f32.mxu0 0.0
      %888 = vmatmul.mubr.f32.gmra.mrb[0].mxu0 %v690
      %v889 = vpop.f32.mrb[0].mxu0
      %v890 = vadd.f32 %v629, %v889
      %v891 = vpop.f32.mrb[0].mxu0
      %892 = vmatprep.mubr.f32.mxu0 0.0
      %893 = vmatmul.mubr.f32.gmra.mrb[0].mxu0 %v693
      %v894 = vpop.f32.mrb[0].mxu0
      %v895 = vadd.f32 %v629, %v894
      %v896 = vpop.f32.mrb[0].mxu0
      %897 = vmatprep.mubr.f32.mxu0 0.0
      %898 = vmatmul.mubr.f32.gmra.mrb[0].mxu0 %v696
      %v899 = vpop.f32.mrb[0].mxu0
      %v900 = vadd.f32 %v629, %v899
      %v901 = vpop.f32.mrb[0].mxu0
      %902 = vmatprep.mubr.f32.mxu0 0.0
      %903 = vmatmul.mubr.f32.gmra.mrb[0].mxu0 %v699
      %v904 = vpop.f32.mrb[0].mxu0
      %v905 = vadd.f32 %v629, %v904
      %v906 = vpop.f32.mrb[0].mxu0
      %907 = vmatprep.mubr.f32.mxu0 0.0
      %908 = vmatmul.mubr.f32.gmra.mrb[0].mxu0 %v702
      %v909 = vpop.f32.mrb[0].mxu0
      %v910 = vadd.f32 %v629, %v909
      %v911 = vpop.f32.mrb[0].mxu0
      %912 = vmatprep.mubr.f32.mxu0 0.0
      %913 = vmatmul.mubr.f32.gmra.mrb[0].mxu0 %v705
      %v914 = vpop.f32.mrb[0].mxu0
      %v915 = vadd.f32 %v629, %v914
      %v916 = vpop.f32.mrb[0].mxu0
      %917 = vmatprep.mubr.f32.mxu0 0.0
      %918 = vmatmul.mubr.f32.gmra.mrb[0].mxu0 %v708
      %v919 = vpop.f32.mrb[0].mxu0
      %v920 = vadd.f32 %v629, %v919
      %v921 = vpop.f32.mrb[0].mxu0
      %922 = vmatprep.mubr.f32.mxu0 0.0
      %923 = vmatmul.mubr.f32.gmra.mrb[0].mxu0 %v711
      %v924 = vpop.f32.mrb[0].mxu0
      %v925 = vadd.f32 %v629, %v924
      %v926 = vpop.f32.mrb[0].mxu0
      %927 = vmatprep.mubr.f32.mxu0 0.0
      %928 = vmatmul.mubr.f32.gmra.mrb[0].mxu0 %v714
      %v929 = vpop.f32.mrb[0].mxu0
      %v930 = vadd.f32 %v629, %v929
      %v931 = vpop.f32.mrb[0].mxu0
      %932 = vmatprep.mubr.f32.mxu0 0.0
      %933 = vmatmul.mubr.f32.gmra.mrb[0].mxu0 %v717
      %v934 = vpop.f32.mrb[0].mxu0
      %v935 = vadd.f32 %v629, %v934
      %v936 = vpop.f32.mrb[0].mxu0
      %937 = vmatprep.mubr.f32.mxu0 0.0
      %938 = vmatmul.mubr.f32.gmra.mrb[0].mxu0 %v720
      %v939 = vpop.f32.mrb[0].mxu0
      %v940 = vadd.f32 %v629, %v939
      %v941 = vpop.f32.mrb[0].mxu0
      %942 = vmatprep.mubr.f32.mxu0 0.0
      %943 = vmatmul.mubr.f32.gmra.mrb[0].mxu0 %v723
      %v944 = vpop.f32.mrb[0].mxu0
      %v945 = vadd.f32 %v629, %v944
      %v946 = vpop.f32.mrb[0].mxu0
      %947 = vmatprep.mubr.f32.mxu0 0.0
      %948 = vmatmul.mubr.f32.gmra.mrb[0].mxu0 %v726
      %v949 = vpop.f32.mrb[0].mxu0
      %v950 = vadd.f32 %v629, %v949
      %v951 = vpop.f32.mrb[0].mxu0
      %952 = vdwg.mxu0
      %vm953 = vcmask 31744
      %954 = vst.msk [vmem:[%s226] sm:$0xff] %vm953, %v795
      %955 = vst.msk [vmem:[%s226 + $0x8] sm:$0xff] %vm953, %v800
      %956 = vst.msk [vmem:[%s226 + $0x10] sm:$0xff] %vm953, %v805
      %957 = vst.msk [vmem:[%s226 + $0x18] sm:$0xff] %vm953, %v810
      %958 = vst.msk [vmem:[%s226 + $0x20] sm:$0xff] %vm953, %v815
      %959 = vst.msk [vmem:[%s226 + $0x28] sm:$0xff] %vm953, %v820
      %960 = vst.msk [vmem:[%s226 + $0x30] sm:$0xff] %vm953, %v825
      %961 = vst.msk [vmem:[%s226 + $0x38] sm:$0xff] %vm953, %v830
      %962 = vst.msk [vmem:[%s226 + $0x40] sm:$0xff] %vm953, %v835
      %963 = vst.msk [vmem:[%s226 + $0x48] sm:$0xff] %vm953, %v840
      %964 = vst.msk [vmem:[%s226 + $0x50] sm:$0xff] %vm953, %v845
      %965 = vst.msk [vmem:[%s226 + $0x58] sm:$0xff] %vm953, %v850
      %966 = vst.msk [vmem:[%s226 + $0x60] sm:$0xff] %vm953, %v855
      %967 = vst.msk [vmem:[%s226 + $0x68] sm:$0xff] %vm953, %v860
      %968 = vst.msk [vmem:[%s226 + $0x70] sm:$0xff] %vm953, %v865
      %969 = vst.msk [vmem:[%s226 + $0x78] sm:$0xff] %vm953, %v870
      %970 = vst.msk [vmem:[%s226 + $0x80] sm:$0xff] %vm953, %v875
      %971 = vst.msk [vmem:[%s226 + $0x88] sm:$0xff] %vm953, %v880
      %972 = vst.msk [vmem:[%s226 + $0x90] sm:$0xff] %vm953, %v885
      %973 = vst.msk [vmem:[%s226 + $0x98] sm:$0xff] %vm953, %v890
      %974 = vst.msk [vmem:[%s226 + $0xa0] sm:$0xff] %vm953, %v895
      %975 = vst.msk [vmem:[%s226 + $0xa8] sm:$0xff] %vm953, %v900
      %976 = vst.msk [vmem:[%s226 + $0xb0] sm:$0xff] %vm953, %v905
      %977 = vst.msk [vmem:[%s226 + $0xb8] sm:$0xff] %vm953, %v910
      %978 = vst.msk [vmem:[%s226 + $0xc0] sm:$0xff] %vm953, %v915
      %979 = vst.msk [vmem:[%s226 + $0xc8] sm:$0xff] %vm953, %v920
      %980 = vst.msk [vmem:[%s226 + $0xd0] sm:$0xff] %vm953, %v925
      %981 = vst.msk [vmem:[%s226 + $0xd8] sm:$0xff] %vm953, %v930
      %982 = vst.msk [vmem:[%s226 + $0xe0] sm:$0xff] %vm953, %v935
      %983 = vst.msk [vmem:[%s226 + $0xe8] sm:$0xff] %vm953, %v940
      %984 = vst.msk [vmem:[%s226 + $0xf0] sm:$0xff] %vm953, %v945
      %985 = vst.msk [vmem:[%s226 + $0xf8] sm:$0xff] %vm953, %v950
      %s986 = smul.u32 32, %s16
      %p987 = scmp.lt.s32.totalorder %s986, 63
      %s988 = scalar_select %p987, %s986, 63
      %s989 = smul.addr %s988, 8
      %s990 = scalar_lea.vmem %s5, %s989
      // Predicated region
      $region41: #{tpu_custom_call.1} parent=39 // pred_check
        %p991 = pneg %p144
      $region42: #{tpu_custom_call.1} parent=39 // pred_check_branch
        %993 = sbr.rel (%p991) target = $region44
      $region43: #{tpu_custom_call.1} parent=39 // pred_region
        %s994 = smul.u32 32, %s16
      $region44: #{tpu_custom_call.1} parent=39 // pred_fallthru
        _
    $region40: #{tpu_custom_call.1} parent=5 // pred_fallthru
      _
    %p995 = scmp.le.s32.totalorder 2, %s11
    // Predicated region
    $region45: #{tpu_custom_call.1} parent=5 // pred_check
      %p996 = pneg %p995
    $region46: #{tpu_custom_call.1} parent=5 // pred_check_branch
      %998 = sbr.rel (%p996) target = $region48
    $region47: #{tpu_custom_call.1} parent=5 // pred_region
      %s999 = ssub.s32 %s11, 2
      // Predicated region
      $region49: #{tpu_custom_call.1} parent=47 // pred_check
        %p1000 = pneg %p150
      $region50: #{tpu_custom_call.1} parent=47 // pred_check_branch
        %1002 = sbr.rel (%p1000) target = $region52
      $region51: #{tpu_custom_call.1} parent=47 // pred_region
        %s1003 = smul.u32 32, %s17
        %p1004 = scmp.lt.s32.totalorder %s1003, 63
        %s1005 = scalar_select %p1004, %s1003, 63
        %s1006 = smul.addr %s1005, 8
        %s1007 = scalar_lea.vmem %s5, %s1006
      $region52: #{tpu_custom_call.1} parent=47 // pred_fallthru
        _
    $region48: #{tpu_custom_call.1} parent=5 // pred_fallthru
      _
  $region6: #{tpu_custom_call.1} parent=0 // loop_footer
    %s15 = sadd.s32 1, %s11
  $region7: #{tpu_custom_call.1} parent=0 // loop_footer_branch
    %10 = sbr.rel target = $region3
  $region8: #{tpu_custom_call.1} parent=0 // loop_exit
    _

</llo_original>
